<compile_context>
chip_gen: v5e
topology: v5e:2x2
jax: 0.10.0
libtpu: 0.0.40
codegen_flags: <defaults>
</compile_context>

<pallas_src>
from typing import NamedTuple

import jax
import jax.numpy as jnp
from jax.experimental import pallas as pl
from jax.experimental.pallas import tpu as pltpu


_LANE = 128
_SUBLANE = 8
_TARGET_BLOCK_BYTES = 4 << 20   # ~4 MiB per streamed (tile, D) block
_MAX_TILE = 4096


def _round_up(x, m):
    return (x + m - 1) // m * m


def _row_tile(n_rows, d, itemsize):
    """Rows per grid step: ~_TARGET_BLOCK_BYTES per streamed block, sublane aligned."""
    sub = max(_SUBLANE, 32 // max(int(itemsize), 1))   # 8 for f32, 16 for bf16
    tile = (_TARGET_BLOCK_BYTES // max(1, d * int(itemsize))) // sub * sub
    tile = max(sub, min(tile, _MAX_TILE))
    tile = min(tile, _round_up(n_rows, sub))           # never exceed the row count
    return int(tile)


def _vmem_budget(tile, d, hp, stream_itemsizes, n_narrow):
    """Explicit scoped-VMEM budget for the double-buffered pipeline."""
    b = sum(2 * tile * d * int(s) for s in stream_itemsizes)   # big streamed blocks
    b += 2 * n_narrow * tile * _LANE * 4                       # narrow (p / noise) blocks
    b += tile * max(hp, _LANE) * 4                             # hidden activation temp
    b += 2 * (d * max(hp, 2) + 8 * max(hp, 2) + 64) * 4        # resident weights (x2 bufs)
    b += 4 << 20                                               # compiler headroom
    return int(min(max(b, 8 << 20), 48 << 20))


def _compiler_params(vmem_bytes):
    # Row axis is fully independent -> shard across TensorCores where available.
    return pltpu.CompilerParams(dimension_semantics=("parallel",),
                                vmem_limit_bytes=int(vmem_bytes))


# ----------------------------------------------------------------------------
# Parameter preparation (done once, outside the per-call wrappers)
# ----------------------------------------------------------------------------
class VMaskParams(NamedTuple):
    w1t: jnp.ndarray   # (D, Hp) f32, H zero-padded to a multiple of 128
    b1: jnp.ndarray    # (1, Hp) f32
    w2t: jnp.ndarray   # (Hp, 2) f32
    b2: jnp.ndarray    # (1, 2)  f32
    wd: jnp.ndarray    # (1, Hp) f32  = w2[1] - w2[0]   (logit-difference weights)
    bd: jnp.ndarray    # (1, 1)  f32  = b2[1] - b2[0]


def prepare_vmask_params(w1, b1, w2, b2):
    """w1:(H,D), b1:(H,), w2:(2,H), b2:(2,) -> lane-aligned, transposed params."""
    H, D = w1.shape
    Hp = _round_up(H, _LANE)
    w1t = jnp.zeros((D, Hp), jnp.float32).at[:, :H].set(w1.T.astype(jnp.float32))
    b1p = jnp.zeros((1, Hp), jnp.float32).at[0, :H].set(b1.astype(jnp.float32))
    w2t = jnp.zeros((Hp, 2), jnp.float32).at[:H, :].set(w2.T.astype(jnp.float32))
    b2p = b2.astype(jnp.float32).reshape(1, 2)
    wd = (w2t[:, 1] - w2t[:, 0]).reshape(1, Hp)
    bd = (b2p[:, 1] - b2p[:, 0]).reshape(1, 1)
    return VMaskParams(w1t, b1p, w2t, b2p, wd, bd)


# ----------------------------------------------------------------------------
# Kernels
# ----------------------------------------------------------------------------
def _stats_kernel(e_ref, w1_ref, b1_ref, w2_ref, b2_ref, p_ref):
    h = jnp.tanh(jnp.dot(e_ref[...].astype(jnp.float32), w1_ref[...],
                         preferred_element_type=jnp.float32) + b1_ref[...])
    p_ref[...] = (jnp.dot(h, w2_ref[...], preferred_element_type=jnp.float32)
                  + b2_ref[...]).astype(p_ref.dtype)


def _mask_eval_kernel(p_ref, x_ref, o_ref):
    p = p_ref[...].astype(jnp.float32)
    prob1 = 1.0 / (1.0 + jnp.exp(p[:, 0:1] - p[:, 1:2]))   # sigmoid(p1-p0) == softmax[:,1]
    o_ref[...] = (prob1 * x_ref[...].astype(jnp.float32)).astype(o_ref.dtype)


def _mask_train_kernel(p_ref, g_ref, x_ref, o_ref):
    p = p_ref[...].astype(jnp.float32)
    d = (p[:, 1:2] - p[:, 0:1]) + g_ref[...]                # g = g1-g0 ~ Logistic(0,1)
    r = (d > 0.0).astype(jnp.float32)                       # hard one-hot, class-1 column
    o_ref[...] = (r * x_ref[...].astype(jnp.float32)).astype(o_ref.dtype)


def _fused_eval_p_kernel(e_ref, w1_ref, b1_ref, w2_ref, b2_ref, p_ref, o_ref):
    e = e_ref[...].astype(jnp.float32)
    h = jnp.tanh(jnp.dot(e, w1_ref[...], preferred_element_type=jnp.float32) + b1_ref[...])
    p = jnp.dot(h, w2_ref[...], preferred_element_type=jnp.float32) + b2_ref[...]
    p_ref[...] = p.astype(p_ref.dtype)
    prob1 = 1.0 / (1.0 + jnp.exp(p[:, 0:1] - p[:, 1:2]))
    o_ref[...] = (prob1 * e).astype(o_ref.dtype)


def _fused_eval_kernel(e_ref, w1_ref, b1_ref, wd_ref, bd_ref, o_ref):
    e = e_ref[...].astype(jnp.float32)
    h = jnp.tanh(jnp.dot(e, w1_ref[...], preferred_element_type=jnp.float32) + b1_ref[...])
    # logit difference p1-p0 via VPU multiply + lane reduce (skips the N=2 MXU pass)
    d = jnp.sum(h * wd_ref[...], axis=-1, keepdims=True) + bd_ref[...]
    prob1 = 1.0 / (1.0 + jnp.exp(-d))
    o_ref[...] = (prob1 * e).astype(o_ref.dtype)


def _fused_train_p_kernel(e_ref, g_ref, w1_ref, b1_ref, w2_ref, b2_ref, p_ref, o_ref):
    e = e_ref[...].astype(jnp.float32)
    h = jnp.tanh(jnp.dot(e, w1_ref[...], preferred_element_type=jnp.float32) + b1_ref[...])
    p = jnp.dot(h, w2_ref[...], preferred_element_type=jnp.float32) + b2_ref[...]
    p_ref[...] = p.astype(p_ref.dtype)
    d = (p[:, 1:2] - p[:, 0:1]) + g_ref[...]
    r = (d > 0.0).astype(jnp.float32)
    o_ref[...] = (r * e).astype(o_ref.dtype)


def _fused_train_kernel(e_ref, g_ref, w1_ref, b1_ref, wd_ref, bd_ref, o_ref):
    e = e_ref[...].astype(jnp.float32)
    h = jnp.tanh(jnp.dot(e, w1_ref[...], preferred_element_type=jnp.float32) + b1_ref[...])
    d = jnp.sum(h * wd_ref[...], axis=-1, keepdims=True) + bd_ref[...] + g_ref[...]
    r = (d > 0.0).astype(jnp.float32)
    o_ref[...] = (r * e).astype(o_ref.dtype)


# ----------------------------------------------------------------------------
# Wrappers (module API)
# ----------------------------------------------------------------------------
def vmask_fused(embeds, params, flag, key=None, return_p=True, tile=None):
    """Fused get_statistics_batch + forward: one streamed pass over embeds.

    embeds: (B, L, D) f32 or bf16 (x == embeds in the VMASK-CNN model).
    Returns (p, x_prime) if return_p else x_prime.
    """
    B, L, D = embeds.shape
    n = B * L
    Hp = params.w1t.shape[1]
    e2 = embeds.reshape(n, D)                      # free reshape, no copy
    it = e2.dtype.itemsize
    tile = tile if tile is not None else _row_tile(n, D, it)
    grid = (pl.cdiv(n, tile),)                     # ragged last block handled by Pallas

    row_spec = pl.BlockSpec((tile, D), lambda i: (i, 0))
    col1_spec = pl.BlockSpec((tile, 1), lambda i: (i, 0))
    two_spec = pl.BlockSpec((tile, 2), lambda i: (i, 0))
    w1_spec = pl.BlockSpec((D, Hp), lambda i: (0, 0))
    b1_spec = pl.BlockSpec((1, Hp), lambda i: (0, 0))
    w2_spec = pl.BlockSpec((Hp, 2), lambda i: (0, 0))
    b2_spec = pl.BlockSpec((1, 2), lambda i: (0, 0))
    wd_spec = pl.BlockSpec((1, Hp), lambda i: (0, 0))
    bd_spec = pl.BlockSpec((1, 1), lambda i: (0, 0))

    train = (flag == 'train')
    if train:
        if key is None:
            raise ValueError("flag='train' requires an explicit PRNG key")
        # g1-g0 of two iid Gumbel(0,1) is Logistic(0,1); only the difference matters
        # for the hard forward value of F.gumbel_softmax(p, hard=True).
        gd = jax.random.logistic(key, (n, 1), jnp.float32)

    n_narrow = (1 if train else 0) + (1 if return_p else 0)
    cp = _compiler_params(_vmem_budget(tile, D, Hp, (it, it), n_narrow))
    x_shape = jax.ShapeDtypeStruct((n, D), embeds.dtype)

    if return_p:
        out_shape = (jax.ShapeDtypeStruct((n, 2), jnp.float32), x_shape)
        out_specs = (two_spec, row_spec)
        if train:
            kern = _fused_train_p_kernel
            in_specs = [row_spec, col1_spec, w1_spec, b1_spec, w2_spec, b2_spec]
            args = (e2, gd, params.w1t, params.b1, params.w2t, params.b2)
        else:
            kern = _fused_eval_p_kernel
            in_specs = [row_spec, w1_spec, b1_spec, w2_spec, b2_spec]
            args = (e2, params.w1t, params.b1, params.w2t, params.b2)
        p, xp = pl.pallas_call(kern, out_shape=out_shape, grid=grid,
                               in_specs=in_specs, out_specs=out_specs,
                               compiler_params=cp)(*args)
        return p.reshape(B, L, 2), xp.reshape(B, L, D)

    if train:
        kern = _fused_train_kernel
        in_specs = [row_spec, col1_spec, w1_spec, b1_spec, wd_spec, bd_spec]
        args = (e2, gd, params.w1t, params.b1, params.wd, params.bd)
    else:
        kern = _fused_eval_kernel
        in_specs = [row_spec, w1_spec, b1_spec, wd_spec, bd_spec]
        args = (e2, params.w1t, params.b1, params.wd, params.bd)
    xp = pl.pallas_call(kern, out_shape=x_shape, grid=grid,
                        in_specs=in_specs, out_specs=row_spec,
                        compiler_params=cp)(*args)
    return xp.reshape(B, L, D)


def vmask_get_statistics(embeds, params, tile=None):
    """get_statistics_batch: embeds (B, L, D) -> p (B, L, 2). (Prefer vmask_fused.)"""
    B, L, D = embeds.shape
    n = B * L
    Hp = params.w1t.shape[1]
    e2 = embeds.reshape(n, D)
    it = e2.dtype.itemsize
    tile = tile if tile is not None else _row_tile(n, D, it)
    cp = _compiler_params(_vmem_budget(tile, D, Hp, (it,), 1))
    p = pl.pallas_call(
        _stats_kernel,
        out_shape=jax.ShapeDtypeStruct((n, 2), jnp.float32),
        grid=(pl.cdiv(n, tile),),
        in_specs=[pl.BlockSpec((tile, D), lambda i: (i, 0)),
                  pl.BlockSpec((D, Hp), lambda i: (0, 0)),
                  pl.BlockSpec((1, Hp), lambda i: (0, 0)),
                  pl.BlockSpec((Hp, 2), lambda i: (0, 0)),
                  pl.BlockSpec((1, 2), lambda i: (0, 0))],
        out_specs=pl.BlockSpec((tile, 2), lambda i: (i, 0)),
        compiler_params=cp,
    )(e2, params.w1t, params.b1, params.w2t, params.b2)
    return p.reshape(B, L, 2)


def vmask_forward(x, p, flag, key=None, tile=None):
    """VMASK.forward(x, p, flag): x (B, L, D), p (B, L, 2). (Prefer vmask_fused.)"""
    B, L, D = x.shape
    n = B * L
    x2 = x.reshape(n, D)
    p2 = p.reshape(n, 2).astype(jnp.float32)
    it = x2.dtype.itemsize
    tile = tile if tile is not None else _row_tile(n, D, it)
    grid = (pl.cdiv(n, tile),)
    x_spec = pl.BlockSpec((tile, D), lambda i: (i, 0))
    p_spec = pl.BlockSpec((tile, 2), lambda i: (i, 0))
    cp = _compiler_params(_vmem_budget(tile, D, 0, (it, it), 2))
    if flag == 'train':
        if key is None:
            raise ValueError("flag='train' requires an explicit PRNG key")
        gd = jax.random.logistic(key, (n, 1), jnp.float32)
        out = pl.pallas_call(
            _mask_train_kernel,
            out_shape=jax.ShapeDtypeStruct((n, D), x.dtype),
            grid=grid,
            in_specs=[p_spec, pl.BlockSpec((tile, 1), lambda i: (i, 0)), x_spec],
            out_specs=x_spec, compiler_params=cp,
        )(p2, gd, x2)
    else:
        out = pl.pallas_call(
            _mask_eval_kernel,
            out_shape=jax.ShapeDtypeStruct((n, D), x.dtype),
            grid=grid,
            in_specs=[p_spec, x_spec],
            out_specs=x_spec, compiler_params=cp,
        )(p2, x2)
    return out.reshape(B, L, D)


# ----------------------------------------------------------------------------
# Self-test
# ----------------------------------------------------------------------------
if __name__ == "__main__":
    key = jax.random.PRNGKey(0)
    ks = jax.random.split(key, 10)

    # primary config: batch=2, seq=8, embed_dim=32, mask_hidden_dim=32
    B, L, D, H = 2, 8, 32, 32
    embeds = jax.random.normal(ks[0], (B, L, D), jnp.float32)
    x = embeds   # in the VMASK-CNN model the masked tensor IS the embedding

    bound1 = 1.0 / (D ** 0.5)
    w1 = jax.random.uniform(ks[1], (H, D), jnp.float32, -bound1, bound1)
    b1 = jax.random.uniform(ks[2], (H,), jnp.float32, -bound1, bound1)
    bound2 = 1.0 / (H ** 0.5)
    w2 = jax.random.uniform(ks[3], (2, H), jnp.float32, -bound2, bound2)
    b2 = jax.random.uniform(ks[4], (2,), jnp.float32, -bound2, bound2)
    params = prepare_vmask_params(w1, b1, w2, b2)

    # pure-JAX references
    p_ref = jnp.tanh(embeds @ w1.T + b1) @ w2.T + b2
    x_eval_ref = x * jax.nn.softmax(p_ref, axis=2)[:, :, 1:2]

    # legacy two-pass API
    p = vmask_get_statistics(embeds, params)
    assert jnp.allclose(p, p_ref, atol=1e-4), "p mismatch"
    x_eval = vmask_forward(x, p, 'eval')
    assert jnp.allclose(x_eval, x_eval_ref, atol=1e-4), "eval branch mismatch"
    x_train = vmask_forward(x, p, 'train', key=ks[5])
    r = jnp.where(x != 0, x_train / x, 0.0)
    assert bool(jnp.all((jnp.abs(r) < 1e-5) | (jnp.abs(r - 1.0) < 1e-5))), \
        "train branch mask not binary"

    # fused single-pass API (production path)
    p_f, x_eval_f = vmask_fused(embeds, params, 'eval')
    assert jnp.allclose(p_f, p_ref, atol=1e-4), "fused p mismatch"
    assert jnp.allclose(x_eval_f, x_eval_ref, atol=1e-4), "fused eval mismatch"

    x_eval_np = vmask_fused(embeds, params, 'eval', return_p=False)
    assert jnp.allclose(x_eval_np, x_eval_ref, atol=1e-4), "fused eval (no-p) mismatch"

    p_t, x_train_f = vmask_fused(embeds, params, 'train', key=ks[6])
    assert jnp.allclose(p_t, p_ref, atol=1e-4), "fused train p mismatch"
    r_f = jnp.where(x != 0, x_train_f / x, 0.0)
    assert bool(jnp.all((jnp.abs(r_f) < 1e-5) | (jnp.abs(r_f - 1.0) < 1e-5))), \
        "fused train mask not binary"

    x_train_np = vmask_fused(embeds, params, 'train', key=ks[6], return_p=False)
    r_np = jnp.where(x != 0, x_train_np / x, 0.0)
    assert bool(jnp.all((jnp.abs(r_np) < 1e-5) | (jnp.abs(r_np - 1.0) < 1e-5))), \
        "fused train (no-p) mask not binary"

    # bf16 streaming variant (halves HBM traffic on v6e/v7x; f32 accumulate inside)
    e_bf = embeds.astype(jnp.bfloat16)
    xb = vmask_fused(e_bf, params, 'eval', return_p=False)
    e_bf32 = e_bf.astype(jnp.float32)
    xb_ref = e_bf32 * jax.nn.softmax(
        jnp.tanh(e_bf32 @ w1.T + b1) @ w2.T + b2, axis=2)[:, :, 1:2]
    assert jnp.allclose(xb.astype(jnp.float32), xb_ref, atol=5e-2), "bf16 eval mismatch"

    # ragged, multi-step grid: B*L=75 rows, tile=64 -> 2 steps with a partial tail block
    B2, L2, D2, H2 = 3, 25, 48, 24
    e2 = jax.random.normal(ks[7], (B2, L2, D2), jnp.float32)
    w1b = jax.random.uniform(ks[8], (H2, D2), jnp.float32, -0.1, 0.1)
    b1b = jnp.zeros((H2,), jnp.float32)
    w2b = jax.random.uniform(ks[9], (2, H2), jnp.float32, -0.2, 0.2)
    b2b = jnp.zeros((2,), jnp.float32)
    params2 = prepare_vmask_params(w1b, b1b, w2b, b2b)
    p2_ref = jnp.tanh(e2 @ w1b.T + b1b) @ w2b.T + b2b
    x2_ref = e2 * jax.nn.softmax(p2_ref, axis=2)[:, :, 1:2]
    p2_out, x2_out = vmask_fused(e2, params2, 'eval', tile=64)
    assert jnp.allclose(p2_out, p2_ref, atol=1e-4), "ragged p mismatch"
    assert jnp.allclose(x2_out, x2_ref, atol=1e-4), "ragged eval mismatch"

    jax.block_until_ready((p, x_eval, x_train, p_f, x_eval_f, x_eval_np,
                           p_t, x_train_f, x_train_np, xb, p2_out, x2_out))
    print("KERNEL_OK")
</pallas_src>

<mosaic_0001>
module attributes {stable_mosaic.version = 11 : i64} {
  func.func @_stats_kernel(%arg0: i32, %arg1: memref<16x32xf32, #tpu.memory_space<vmem>>, %arg2: memref<32x128xf32, #tpu.memory_space<vmem>>, %arg3: memref<1x128xf32, #tpu.memory_space<vmem>>, %arg4: memref<128x2xf32, #tpu.memory_space<vmem>>, %arg5: memref<1x2xf32, #tpu.memory_space<vmem>>, %arg6: memref<16x2xf32, #tpu.memory_space<vmem>>) attributes {dimension_semantics = [#tpu.dimension_semantics<parallel>], iteration_bounds = array<i64: 1>, scalar_prefetch = 0 : i64, scratch_operands = 0 : i64, tpu.core_type = #tpu.core_type<tc>, window_params = [{transform_indices = @transform_0, window_bounds = array<i64: 16, 32>}, {pipeline_mode = #tpu.pipeline_mode<synchronous>, transform_indices = @transform_1, window_bounds = array<i64: 32, 128>}, {pipeline_mode = #tpu.pipeline_mode<synchronous>, transform_indices = @transform_2, window_bounds = array<i64: 1, 128>}, {pipeline_mode = #tpu.pipeline_mode<synchronous>, transform_indices = @transform_3, window_bounds = array<i64: 128, 2>}, {pipeline_mode = #tpu.pipeline_mode<synchronous>, transform_indices = @transform_4, window_bounds = array<i64: 1, 2>}, {transform_indices = @transform_5, window_bounds = array<i64: 16, 2>}]} {
    %c0 = arith.constant 0 : index
    %c0_0 = arith.constant 0 : index
    %0 = vector.load %arg1[%c0, %c0_0] : memref<16x32xf32, #tpu.memory_space<vmem>>, vector<16x32xf32>
    %c0_1 = arith.constant 0 : index
    %c0_2 = arith.constant 0 : index
    %1 = vector.load %arg2[%c0_1, %c0_2] : memref<32x128xf32, #tpu.memory_space<vmem>>, vector<32x128xf32>
    %cst = arith.constant dense<0.000000e+00> : vector<16x128xf32>
    %2 = tpu.matmul %0, %1, %cst {dimension_numbers = #tpu.dot_dimension_numbers<[1], [0], [0], [1], [0, 0, 1, 1], [], []>} : vector<16x32xf32>, vector<32x128xf32>, vector<16x128xf32> -> vector<16x128xf32>
    %c0_3 = arith.constant 0 : index
    %c0_4 = arith.constant 0 : index
    %3 = vector.load %arg3[%c0_3, %c0_4] : memref<1x128xf32, #tpu.memory_space<vmem>>, vector<1x128xf32>
    %4 = vector.broadcast %3 : vector<1x128xf32> to vector<16x128xf32>
    %5 = arith.addf %2, %4 : vector<16x128xf32>
    %6 = math.tanh %5 : vector<16x128xf32>
    %c0_5 = arith.constant 0 : index
    %c0_6 = arith.constant 0 : index
    %7 = vector.load %arg4[%c0_5, %c0_6] : memref<128x2xf32, #tpu.memory_space<vmem>>, vector<128x2xf32>
    %cst_7 = arith.constant dense<0.000000e+00> : vector<16x2xf32>
    %8 = tpu.matmul %6, %7, %cst_7 {dimension_numbers = #tpu.dot_dimension_numbers<[1], [0], [0], [1], [0, 0, 1, 1], [], []>} : vector<16x128xf32>, vector<128x2xf32>, vector<16x2xf32> -> vector<16x2xf32>
    %c0_8 = arith.constant 0 : index
    %c0_9 = arith.constant 0 : index
    %9 = vector.load %arg5[%c0_8, %c0_9] : memref<1x2xf32, #tpu.memory_space<vmem>>, vector<1x2xf32>
    %10 = vector.broadcast %9 : vector<1x2xf32> to vector<16x2xf32>
    %11 = arith.addf %8, %10 : vector<16x2xf32>
    %c0_10 = arith.constant 0 : index
    %c0_11 = arith.constant 0 : index
    %12 = vector.load %arg6[%c0_10, %c0_11] : memref<16x2xf32, #tpu.memory_space<vmem>>, vector<16x2xf32>
    tpu.vector_store %arg6[%c0_10, %c0_11], %11 {strides = array<i32>} : memref<16x2xf32, #tpu.memory_space<vmem>>, vector<16x2xf32>,
    return
  }
  func.func @transform_0(%arg0: i32) -> (i32, i32) {
    %c0_i32 = arith.constant 0 : i32
    %c0_i32_0 = arith.constant 0 : i32
    return %arg0, %c0_i32 : i32, i32
  }
  func.func @transform_1(%arg0: i32) -> (i32, i32) {
    %c0_i32 = arith.constant 0 : i32
    %c0_i32_0 = arith.constant 0 : i32
    %c0_i32_1 = arith.constant 0 : i32
    return %c0_i32, %c0_i32_0 : i32, i32
  }
  func.func @transform_2(%arg0: i32) -> (i32, i32) {
    %c0_i32 = arith.constant 0 : i32
    %c0_i32_0 = arith.constant 0 : i32
    %c0_i32_1 = arith.constant 0 : i32
    return %c0_i32, %c0_i32_0 : i32, i32
  }
  func.func @transform_3(%arg0: i32) -> (i32, i32) {
    %c0_i32 = arith.constant 0 : i32
    %c0_i32_0 = arith.constant 0 : i32
    %c0_i32_1 = arith.constant 0 : i32
    return %c0_i32, %c0_i32_0 : i32, i32
  }
  func.func @transform_4(%arg0: i32) -> (i32, i32) {
    %c0_i32 = arith.constant 0 : i32
    %c0_i32_0 = arith.constant 0 : i32
    %c0_i32_1 = arith.constant 0 : i32
    return %c0_i32, %c0_i32_0 : i32, i32
  }
  func.func @transform_5(%arg0: i32) -> (i32, i32) {
    %c0_i32 = arith.constant 0 : i32
    %c0_i32_0 = arith.constant 0 : i32
    return %arg0, %c0_i32 : i32, i32
  }
}

</mosaic_0001>

<llo_original>
// kernel: tpu_custom_call.1
$region0: #{tpu_custom_call.1}
  #allocation0 [shape = 'u32[]', space=smem, size = 0x4, offset = 0x4, fixed_abs, tag = 'smem constant byte address 0x4 - core index']
  #allocation1 [shape = 'u32[72,128]{1,0:T(1,128)}', space=vmem, size = 0x9000, scoped, tag = 'internal scratch']
  %s0 = inlined_call_operand.vmem [shape: f32[16,32], index: 0, kind: input, shape index: {}]
  %s1 = inlined_call_operand.vmem [shape: f32[32,128], index: 1, kind: input, shape index: {}]
  %s2 = inlined_call_operand.vmem [shape: f32[1,128], index: 2, kind: input, shape index: {}]
  %s3 = inlined_call_operand.vmem [shape: f32[128,2], index: 3, kind: input, shape index: {}]
  %s4 = inlined_call_operand.vmem [shape: f32[1,2], index: 4, kind: input, shape index: {}]
  %s5 = inlined_call_operand.vmem [shape: f32[16,2], index: 5, kind: output, shape index: {}]
  %s6 = sld [smem:[#allocation0]]
  $region30: #{tpu_custom_call.1} parent=0
    _
  %s8 = ssub.s32 1, %s6
  %s9 = scalar_select 0, %s8, %s6
  // Predicated region
  $region2: #{tpu_custom_call.1} parent=0 // pred_check
    _
  $region3: #{tpu_custom_call.1} parent=0 // pred_check_branch
    %11 = sbr.rel (0) target = $region5
  $region4: #{tpu_custom_call.1} parent=0 // pred_region
    _
  $region5: #{tpu_custom_call.1} parent=0 // pred_fallthru
    _
  // Predicated region
  $region6: #{tpu_custom_call.1} parent=0 // pred_check
    _
  $region7: #{tpu_custom_call.1} parent=0 // pred_check_branch
    %13 = sbr.rel (0) target = $region9
  $region8: #{tpu_custom_call.1} parent=0 // pred_region
    _
  $region9: #{tpu_custom_call.1} parent=0 // pred_fallthru
    _
  // Predicated region
  $region10: #{tpu_custom_call.1} parent=0 // pred_check
    _
  $region11: #{tpu_custom_call.1} parent=0 // pred_check_branch
    %15 = sbr.rel (0) target = $region13
  $region12: #{tpu_custom_call.1} parent=0 // pred_region
    _
  $region13: #{tpu_custom_call.1} parent=0 // pred_fallthru
    _
  // Predicated region
  $region14: #{tpu_custom_call.1} parent=0 // pred_check
    _
  $region15: #{tpu_custom_call.1} parent=0 // pred_check_branch
    %17 = sbr.rel (0) target = $region17
  $region16: #{tpu_custom_call.1} parent=0 // pred_region
    _
  $region17: #{tpu_custom_call.1} parent=0 // pred_fallthru
    _
  // Predicated region
  $region18: #{tpu_custom_call.1} parent=0 // pred_check
    _
  $region19: #{tpu_custom_call.1} parent=0 // pred_check_branch
    %19 = sbr.rel (0) target = $region21
  $region20: #{tpu_custom_call.1} parent=0 // pred_region
    _
  $region21: #{tpu_custom_call.1} parent=0 // pred_fallthru
    _
  %v20 = vld [vmem:[%s0] sm:$0xff]
  %v21 = vld [vmem:[%s0 + $0x8] sm:$0xff]
  %v22 = vld [vmem:[%s1] sm:$0xff]
  %v23 = vld [vmem:[%s1 + $0x8] sm:$0xff]
  %v24 = vld [vmem:[%s1 + $0x10] sm:$0xff]
  %v25 = vld [vmem:[%s1 + $0x18] sm:$0xff]
  %v26 = vld [vmem:[%s2] sm:$0x1]
  %v28 = vperm.slane %v26, 0
  %vm30 = vcmask 261120
  %v32 = vsel %vm30, %v20, 0
  %v35 = vsel %vm30, %v21, 0
  %37 = vmatpush.msra.mxu0 0.0
  %38 = vmatpush.msra.mxu0 0.0
  %39 = vmatpush.msra.mxu0 0.0
  %40 = vmatpush.msra.mxu0 0.0
  %41 = vmatpush.msra.mxu0 0.0
  %42 = vmatpush.msra.mxu0 0.0
  %43 = vmatpush.msra.mxu0 0.0
  %44 = vmatpush.msra.mxu0 0.0
  %45 = vmatpush.msra.mxu0 0.0
  %46 = vmatpush.msra.mxu0 0.0
  %47 = vmatpush.msra.mxu0 0.0
  %48 = vmatpush.msra.mxu0 0.0
  %49 = vmatpush.msra.mxu0 %v25
  %50 = vmatpush.msra.mxu0 %v24
  %51 = vmatpush.msra.mxu0 %v23
  %52 = vmatpush.msra.mxu0 %v22
  %53 = vmatmul.f32.gmra.mxu0 %v32
  %v54 = vpop.f32.mrf.mxu0
  %v55 = vadd.f32 %v28, %v54
  %56 = vmatmul.f32.gmra.mxu0 %v35
  %v57 = vpop.f32.mrf.mxu0
  %v58 = vadd.f32 %v28, %v57
  %59 = vdwg.mxu0
  %v60 = vtanh.pop %v55
  %v61 = vtanh.pop %v58
  %v62 = vld [vmem:[%s3] sm:$0xff]
  %v63 = vld [vmem:[%s3 + $0x8] sm:$0xff]
  %v64 = vld [vmem:[%s3 + $0x10] sm:$0xff]
  %v65 = vld [vmem:[%s3 + $0x18] sm:$0xff]
  %v66 = vld [vmem:[%s3 + $0x20] sm:$0xff]
  %v67 = vld [vmem:[%s3 + $0x28] sm:$0xff]
  %v68 = vld [vmem:[%s3 + $0x30] sm:$0xff]
  %v69 = vld [vmem:[%s3 + $0x38] sm:$0xff]
  %v70 = vld [vmem:[%s3 + $0x40] sm:$0xff]
  %v71 = vld [vmem:[%s3 + $0x48] sm:$0xff]
  %v72 = vld [vmem:[%s3 + $0x50] sm:$0xff]
  %v73 = vld [vmem:[%s3 + $0x58] sm:$0xff]
  %v74 = vld [vmem:[%s3 + $0x60] sm:$0xff]
  %v75 = vld [vmem:[%s3 + $0x68] sm:$0xff]
  %v76 = vld [vmem:[%s3 + $0x70] sm:$0xff]
  %v77 = vld [vmem:[%s3 + $0x78] sm:$0xff]
  %v78 = vld [vmem:[%s4] sm:$0x1]
  %v80 = vperm.slane %v78, 0
  %82 = vmatpush.msra.mxu0 %v77
  %83 = vmatpush.msra.mxu0 %v76
  %84 = vmatpush.msra.mxu0 %v75
  %85 = vmatpush.msra.mxu0 %v74
  %86 = vmatpush.msra.mxu0 %v73
  %87 = vmatpush.msra.mxu0 %v72
  %88 = vmatpush.msra.mxu0 %v71
  %89 = vmatpush.msra.mxu0 %v70
  %90 = vmatpush.msra.mxu0 %v69
  %91 = vmatpush.msra.mxu0 %v68
  %92 = vmatpush.msra.mxu0 %v67
  %93 = vmatpush.msra.mxu0 %v66
  %94 = vmatpush.msra.mxu0 %v65
  %95 = vmatpush.msra.mxu0 %v64
  %96 = vmatpush.msra.mxu0 %v63
  %97 = vmatpush.msra.mxu0 %v62
  %98 = vmatmul.f32.gmra.mxu0 %v60
  %v99 = vpop.f32.mrf.mxu0
  %v100 = vadd.f32 %v80, %v99
  %101 = vmatmul.f32.gmra.mxu0 %v61
  %v102 = vpop.f32.mrf.mxu0
  %v103 = vadd.f32 %v80, %v102
  %104 = vdwg.mxu0
  %vm105 = vcmask 15360
  %106 = vst.msk [vmem:[%s5] sm:$0xff] %vm105, %v100
  %107 = vst.msk [vmem:[%s5 + $0x8] sm:$0xff] %vm105, %v103
  // Predicated region
  $region22: #{tpu_custom_call.1} parent=0 // pred_check
    _
  $region23: #{tpu_custom_call.1} parent=0 // pred_check_branch
    %109 = sbr.rel (0) target = $region25
  $region24: #{tpu_custom_call.1} parent=0 // pred_region
    _
  $region25: #{tpu_custom_call.1} parent=0 // pred_fallthru
    _
  // Predicated region
  $region26: #{tpu_custom_call.1} parent=0 // pred_check
    _
  $region27: #{tpu_custom_call.1} parent=0 // pred_check_branch
    %111 = sbr.rel (0) target = $region29
  $region28: #{tpu_custom_call.1} parent=0 // pred_region
    _
  $region29: #{tpu_custom_call.1} parent=0 // pred_fallthru
    _

</llo_original>
